<compile_context>
chip_gen: v5e
topology: v5e:2x2
jax: 0.10.0
libtpu: 0.0.40
codegen_flags: <defaults>
</compile_context>

<pallas_src>
import jax
import jax.numpy as jnp
import numpy as np
from jax.experimental import pallas as pl
from jax.experimental.pallas import tpu as pltpu


def _estimator_ids(n, num_estimators):
    """Per-sample estimator index, matching torch repeat_interleave + wrap-around."""
    if num_estimators > n:
        # torch errors in this case (empty repeated parameter list); be explicit.
        raise ValueError(
            "num_estimators must not exceed the batch size "
            f"(got batch={n}, num_estimators={num_estimators})")
    epe = n // num_estimators
    extra = n % num_estimators
    ids = np.concatenate(
        [np.repeat(np.arange(num_estimators), epe), np.arange(extra) // epe]
    ).astype(np.int32)
    return ids


def _round_up(x, m):
    return ((x + m - 1) // m) * m


def _pick_batch_block(n, per_sample_buf_bytes, budget_bytes=32 << 20,
                      min_grid=4, min_tile_bytes=4 << 20):
    """Largest block whose double-buffered working set stays under ~budget_bytes.
    Prefer >= min_grid steps (so a "parallel" batch axis keeps both v7x TensorCores
    busy with >= 2 steps each), but only if the per-step buffers stay large enough to
    amortize the ~0.35 us per-step grid overhead."""
    per = max(int(per_sample_buf_bytes), 1)
    blk = max(1, min(n, budget_bytes // per))
    if pl.cdiv(n, blk) < min_grid:
        alt = max(1, pl.cdiv(n, min_grid))
        if alt * per >= min_tile_bytes:
            blk = min(blk, alt)
    return blk


def _output_conv_kernel(x_ref, p_ref, o_ref):
    # x_ref: (blk, Cin, HW)       activation block (lane dim = HW, lane-dense)
    # p_ref: (blk, Cout, Cin+1)   per-sample folded weight (cols :Cin) + bias (col Cin), f32
    # o_ref: (blk, Cout, HW)
    blk, cin, hw = x_ref.shape
    cout = o_ref.shape[1]

    p = p_ref[...]                             # small, already f32
    x = x_ref[...].astype(jnp.float32)         # f32 accumulate regardless of I/O dtype
    b = p[:, :, cin:cin + 1]                   # (blk, Cout, 1)

    if cin * cout <= 256:
        # Tiny contraction (this head): unrolled VPU broadcast multiply-accumulate.
        # NOTE(v7x): Cout < 8 leaves half the sublanes of each acc vreg unused; pack two
        # samples per vreg if a bundle dump shows VALU as the binding slot on v7x.
        acc = b + p[:, :, 0:1] * x[:, 0:1, :]
        for ci in range(1, cin):
            acc = acc + p[:, :, ci:ci + 1] * x[:, ci:ci + 1, :]
    else:
        # Larger channel counts: batched MXU matmul, f32 accumulation.
        w = p[:, :, :cin]
        acc = jax.lax.dot_general(
            w, x, (((2,), (1,)), ((0,), (0,))),
            preferred_element_type=jnp.float32) + b

    o_ref[...] = acc.astype(o_ref.dtype)


def output_conv_pallas(x_nchw, weight, r_group, s_group, bias, num_estimators,
                       block_override=None):
    """x_nchw: (N, Cin, H, W); weight: (Cout, Cin, 1, 1); r_group: (E, Cin);
    s_group, bias: (E, Cout).  Returns (N, Cout, H, W) in x_nchw's dtype
    (pass bf16 activations to halve HBM traffic; accumulation stays f32)."""
    n, cin, h, w_sp = x_nchw.shape
    cout = weight.shape[0]
    hw = h * w_sp

    # NCHW -> (N, Cin, H*W): free reshape.  Pad the lane dim to a multiple of 128 if
    # needed so input loads / output stores stay lane-dense (unmasked vst).
    x = x_nchw.reshape(n, cin, hw)
    hw_p = _round_up(hw, 128)
    if hw_p != hw:
        x = jnp.pad(x, ((0, 0), (0, 0), (0, hw_p - hw)))

    # Fold r/s into a tiny per-estimator effective weight, append bias as an extra
    # column, then gather per sample.  Params stay f32 for accuracy.
    w2d = weight.reshape(cout, cin).astype(jnp.float32)
    w_eff = (s_group.astype(jnp.float32)[:, :, None]
             * w2d[None, :, :]
             * r_group.astype(jnp.float32)[:, None, :])             # (E, Cout, Cin)
    p_eff = jnp.concatenate(
        [w_eff, bias.astype(jnp.float32)[:, :, None]], axis=-1)     # (E, Cout, Cin+1)
    ids = _estimator_ids(n, num_estimators)
    p_all = p_eff[ids]                                              # (N, Cout, Cin+1)

    # Per-sample double-buffered VMEM bytes: activations + output in the caller's dtype,
    # params in their (8,128)-padded f32 VMEM tile.
    itemsize = x.dtype.itemsize
    par_tile = _round_up(cout, 8) * _round_up(cin + 1, 128) * 4
    per_sample_buf = 2 * (cin * hw_p * itemsize + cout * hw_p * itemsize + par_tile)
    blk = _pick_batch_block(n, per_sample_buf)
    if block_override is not None:
        blk = max(1, min(int(block_override), n))
    grid = (pl.cdiv(n, blk),)

    working = blk * per_sample_buf
    vmem_limit = int(min(56 << 20, max(16 << 20, working + (8 << 20))))

    out = pl.pallas_call(
        _output_conv_kernel,
        out_shape=jax.ShapeDtypeStruct((n, cout, hw_p), x.dtype),
        grid_spec=pltpu.PrefetchScalarGridSpec(
            num_scalar_prefetch=0,
            grid=grid,
            in_specs=[
                pl.BlockSpec((blk, cin, hw_p), lambda i: (i, 0, 0)),      # activations
                pl.BlockSpec((blk, cout, cin + 1), lambda i: (i, 0, 0)),  # per-block params
            ],
            out_specs=pl.BlockSpec((blk, cout, hw_p), lambda i: (i, 0, 0)),
        ),
        compiler_params=pltpu.CompilerParams(
            dimension_semantics=("parallel",),   # batch axis: megacore-shardable on v7x
            vmem_limit_bytes=vmem_limit),
        cost_estimate=pl.CostEstimate(
            flops=2 * n * cout * cin * hw_p,
            transcendentals=0,
            bytes_accessed=(n * cin * hw_p + n * cout * hw_p) * int(itemsize)
                           + int(p_all.size) * 4),
    )(x, p_all)

    if hw_p != hw:
        out = out[:, :, :hw]
    return out.reshape(n, cout, h, w_sp)


def _reference(x_nchw, weight, r_group, s_group, bias, num_estimators):
    n, cin, h, w_sp = x_nchw.shape
    cout = weight.shape[0]
    ids = _estimator_ids(n, num_estimators)        # same wrap semantics as the kernel
    xf = x_nchw.astype(jnp.float32)
    r = r_group.astype(jnp.float32)[ids][:, :, None, None]
    s = s_group.astype(jnp.float32)[ids][:, :, None, None]
    b = bias.astype(jnp.float32)[ids][:, :, None, None]
    y = jnp.einsum("nchw,oc->nohw", xf * r,
                   weight.reshape(cout, cin).astype(jnp.float32))
    return y * s + b


if __name__ == "__main__":
    key = jax.random.PRNGKey(0)

    def make_params(k, cin, cout, e):
        k1, k2, k3, k4 = jax.random.split(k, 4)
        weight = 0.1 * jax.random.normal(k1, (cout, cin, 1, 1), jnp.float32)
        r_group = jax.random.normal(k2, (e, cin), jnp.float32)
        s_group = jax.random.normal(k3, (e, cout), jnp.float32)
        bias = jax.random.normal(k4, (e, cout), jnp.float32)
        return weight, r_group, s_group, bias

    cases = [
        # (N, Cin, Cout, E, H,  W,  dtype,        atol, rtol, block_override)
        (4,  8,  4,  2, 16, 16, jnp.float32,  1e-5, 1e-5, None),  # divisible batch
        (5,  8,  4,  2, 16, 16, jnp.float32,  1e-5, 1e-5, None),  # wrap-around batch
        (5,  8,  4,  2, 16, 16, jnp.float32,  1e-5, 1e-5, 2),     # partial trailing block (cdiv grid)
        (6,  8,  4,  2, 16, 16, jnp.bfloat16, 5e-2, 5e-2, None),  # bf16 I/O (primary perf lever)
        (4,  8,  4,  2, 10, 10, jnp.float32,  1e-5, 1e-5, None),  # H*W not multiple of 128 (lane pad)
        (2, 32, 16,  2, 16, 16, jnp.float32,  1e-4, 1e-4, None),  # MXU fallback branch
    ]

    for idx, (N, cin, cout, E, H, W, dt, atol, rtol, blko) in enumerate(cases):
        kx, kp, key = jax.random.split(key, 3)
        weight, r_group, s_group, bias = make_params(kp, cin, cout, E)
        x = jax.random.normal(kx, (N, cin, H, W), jnp.float32).astype(dt)

        out = output_conv_pallas(x, weight, r_group, s_group, bias, E,
                                 block_override=blko)
        jax.block_until_ready(out)
        assert out.shape == (N, cout, H, W), f"case {idx}: shape {out.shape}"
        assert out.dtype == dt, f"case {idx}: dtype {out.dtype}"

        expected = _reference(x, weight, r_group, s_group, bias, E)
        err = jnp.max(jnp.abs(out.astype(jnp.float32) - expected))
        assert jnp.allclose(out.astype(jnp.float32), expected,
                            atol=atol, rtol=rtol), f"case {idx}: max err {err}"

    print("KERNEL_OK")
</pallas_src>

<mosaic_0001>
module attributes {stable_mosaic.version = 11 : i64} {
  func.func @_output_conv_kernel(%arg0: i32, %arg1: memref<4x8x256xf32, #tpu.memory_space<vmem>>, %arg2: memref<4x4x9xf32, #tpu.memory_space<vmem>>, %arg3: memref<4x4x256xf32, #tpu.memory_space<vmem>>) attributes {dimension_semantics = [#tpu.dimension_semantics<parallel>], iteration_bounds = array<i64: 1>, scalar_prefetch = 0 : i64, scratch_operands = 0 : i64, tpu.core_type = #tpu.core_type<tc>, window_params = [{transform_indices = @transform_0, window_bounds = array<i64: 4, 8, 256>}, {transform_indices = @transform_1, window_bounds = array<i64: 4, 4, 9>}, {transform_indices = @transform_2, window_bounds = array<i64: 4, 4, 256>}]} {
    %c0 = arith.constant 0 : index
    %c0_0 = arith.constant 0 : index
    %c0_1 = arith.constant 0 : index
    %0 = vector.load %arg2[%c0, %c0_0, %c0_1] : memref<4x4x9xf32, #tpu.memory_space<vmem>>, vector<4x4x9xf32>
    %c0_2 = arith.constant 0 : index
    %c0_3 = arith.constant 0 : index
    %c0_4 = arith.constant 0 : index
    %1 = vector.load %arg1[%c0_2, %c0_3, %c0_4] : memref<4x8x256xf32, #tpu.memory_space<vmem>>, vector<4x8x256xf32>
    %2 = vector.extract_strided_slice %0 {offsets = [0, 0, 8], sizes = [4, 4, 1], strides = [1, 1, 1]} : vector<4x4x9xf32> to vector<4x4x1xf32>
    %3 = vector.extract_strided_slice %0 {offsets = [0, 0, 0], sizes = [4, 4, 1], strides = [1, 1, 1]} : vector<4x4x9xf32> to vector<4x4x1xf32>
    %4 = vector.extract_strided_slice %1 {offsets = [0, 0, 0], sizes = [4, 1, 256], strides = [1, 1, 1]} : vector<4x8x256xf32> to vector<4x1x256xf32>
    %5 = vector.broadcast %3 : vector<4x4x1xf32> to vector<4x4x256xf32>
    %6 = vector.broadcast %4 : vector<4x1x256xf32> to vector<4x4x256xf32>
    %7 = arith.mulf %5, %6 : vector<4x4x256xf32>
    %8 = vector.broadcast %2 : vector<4x4x1xf32> to vector<4x4x256xf32>
    %9 = arith.addf %8, %7 : vector<4x4x256xf32>
    %10 = vector.extract_strided_slice %0 {offsets = [0, 0, 1], sizes = [4, 4, 1], strides = [1, 1, 1]} : vector<4x4x9xf32> to vector<4x4x1xf32>
    %11 = vector.extract_strided_slice %1 {offsets = [0, 1, 0], sizes = [4, 1, 256], strides = [1, 1, 1]} : vector<4x8x256xf32> to vector<4x1x256xf32>
    %12 = vector.broadcast %10 : vector<4x4x1xf32> to vector<4x4x256xf32>
    %13 = vector.broadcast %11 : vector<4x1x256xf32> to vector<4x4x256xf32>
    %14 = arith.mulf %12, %13 : vector<4x4x256xf32>
    %15 = arith.addf %9, %14 : vector<4x4x256xf32>
    %16 = vector.extract_strided_slice %0 {offsets = [0, 0, 2], sizes = [4, 4, 1], strides = [1, 1, 1]} : vector<4x4x9xf32> to vector<4x4x1xf32>
    %17 = vector.extract_strided_slice %1 {offsets = [0, 2, 0], sizes = [4, 1, 256], strides = [1, 1, 1]} : vector<4x8x256xf32> to vector<4x1x256xf32>
    %18 = vector.broadcast %16 : vector<4x4x1xf32> to vector<4x4x256xf32>
    %19 = vector.broadcast %17 : vector<4x1x256xf32> to vector<4x4x256xf32>
    %20 = arith.mulf %18, %19 : vector<4x4x256xf32>
    %21 = arith.addf %15, %20 : vector<4x4x256xf32>
    %22 = vector.extract_strided_slice %0 {offsets = [0, 0, 3], sizes = [4, 4, 1], strides = [1, 1, 1]} : vector<4x4x9xf32> to vector<4x4x1xf32>
    %23 = vector.extract_strided_slice %1 {offsets = [0, 3, 0], sizes = [4, 1, 256], strides = [1, 1, 1]} : vector<4x8x256xf32> to vector<4x1x256xf32>
    %24 = vector.broadcast %22 : vector<4x4x1xf32> to vector<4x4x256xf32>
    %25 = vector.broadcast %23 : vector<4x1x256xf32> to vector<4x4x256xf32>
    %26 = arith.mulf %24, %25 : vector<4x4x256xf32>
    %27 = arith.addf %21, %26 : vector<4x4x256xf32>
    %28 = vector.extract_strided_slice %0 {offsets = [0, 0, 4], sizes = [4, 4, 1], strides = [1, 1, 1]} : vector<4x4x9xf32> to vector<4x4x1xf32>
    %29 = vector.extract_strided_slice %1 {offsets = [0, 4, 0], sizes = [4, 1, 256], strides = [1, 1, 1]} : vector<4x8x256xf32> to vector<4x1x256xf32>
    %30 = vector.broadcast %28 : vector<4x4x1xf32> to vector<4x4x256xf32>
    %31 = vector.broadcast %29 : vector<4x1x256xf32> to vector<4x4x256xf32>
    %32 = arith.mulf %30, %31 : vector<4x4x256xf32>
    %33 = arith.addf %27, %32 : vector<4x4x256xf32>
    %34 = vector.extract_strided_slice %0 {offsets = [0, 0, 5], sizes = [4, 4, 1], strides = [1, 1, 1]} : vector<4x4x9xf32> to vector<4x4x1xf32>
    %35 = vector.extract_strided_slice %1 {offsets = [0, 5, 0], sizes = [4, 1, 256], strides = [1, 1, 1]} : vector<4x8x256xf32> to vector<4x1x256xf32>
    %36 = vector.broadcast %34 : vector<4x4x1xf32> to vector<4x4x256xf32>
    %37 = vector.broadcast %35 : vector<4x1x256xf32> to vector<4x4x256xf32>
    %38 = arith.mulf %36, %37 : vector<4x4x256xf32>
    %39 = arith.addf %33, %38 : vector<4x4x256xf32>
    %40 = vector.extract_strided_slice %0 {offsets = [0, 0, 6], sizes = [4, 4, 1], strides = [1, 1, 1]} : vector<4x4x9xf32> to vector<4x4x1xf32>
    %41 = vector.extract_strided_slice %1 {offsets = [0, 6, 0], sizes = [4, 1, 256], strides = [1, 1, 1]} : vector<4x8x256xf32> to vector<4x1x256xf32>
    %42 = vector.broadcast %40 : vector<4x4x1xf32> to vector<4x4x256xf32>
    %43 = vector.broadcast %41 : vector<4x1x256xf32> to vector<4x4x256xf32>
    %44 = arith.mulf %42, %43 : vector<4x4x256xf32>
    %45 = arith.addf %39, %44 : vector<4x4x256xf32>
    %46 = vector.extract_strided_slice %0 {offsets = [0, 0, 7], sizes = [4, 4, 1], strides = [1, 1, 1]} : vector<4x4x9xf32> to vector<4x4x1xf32>
    %47 = vector.extract_strided_slice %1 {offsets = [0, 7, 0], sizes = [4, 1, 256], strides = [1, 1, 1]} : vector<4x8x256xf32> to vector<4x1x256xf32>
    %48 = vector.broadcast %46 : vector<4x4x1xf32> to vector<4x4x256xf32>
    %49 = vector.broadcast %47 : vector<4x1x256xf32> to vector<4x4x256xf32>
    %50 = arith.mulf %48, %49 : vector<4x4x256xf32>
    %51 = arith.addf %45, %50 : vector<4x4x256xf32>
    %c0_5 = arith.constant 0 : index
    %c0_6 = arith.constant 0 : index
    %c0_7 = arith.constant 0 : index
    %52 = vector.load %arg3[%c0_5, %c0_6, %c0_7] : memref<4x4x256xf32, #tpu.memory_space<vmem>>, vector<4x4x256xf32>
    tpu.vector_store %arg3[%c0_5, %c0_6, %c0_7], %51 {strides = array<i32>} : memref<4x4x256xf32, #tpu.memory_space<vmem>>, vector<4x4x256xf32>,
    return
  }
  func.func @transform_0(%arg0: i32) -> (i32, i32, i32) {
    %c0_i32 = arith.constant 0 : i32
    %c0_i32_0 = arith.constant 0 : i32
    %c0_i32_1 = arith.constant 0 : i32
    return %arg0, %c0_i32, %c0_i32_0 : i32, i32, i32
  }
  func.func @transform_1(%arg0: i32) -> (i32, i32, i32) {
    %c0_i32 = arith.constant 0 : i32
    %c0_i32_0 = arith.constant 0 : i32
    %c0_i32_1 = arith.constant 0 : i32
    return %arg0, %c0_i32, %c0_i32_0 : i32, i32, i32
  }
  func.func @transform_2(%arg0: i32) -> (i32, i32, i32) {
    %c0_i32 = arith.constant 0 : i32
    %c0_i32_0 = arith.constant 0 : i32
    %c0_i32_1 = arith.constant 0 : i32
    return %arg0, %c0_i32, %c0_i32_0 : i32, i32, i32
  }
}

</mosaic_0001>

<llo_original>
// kernel: tpu_custom_call.1
$region0: #{tpu_custom_call.1}
  #allocation0 [shape = 'u32[]', space=smem, size = 0x4, offset = 0x4, fixed_abs, tag = 'smem constant byte address 0x4 - core index']
  #allocation1 [shape = 'u32[72,128]{1,0:T(1,128)}', space=vmem, size = 0x9000, scoped, tag = 'internal scratch']
  %s0 = inlined_call_operand.hbm [shape: f32[4,8,256], index: 0, kind: input, shape index: {}]
  %s1 = inlined_call_operand.hbm [shape: f32[4,4,9], index: 1, kind: input, shape index: {}]
  %s2 = inlined_call_operand.hbm [shape: f32[4,4,256], index: 2, kind: output, shape index: {}]
  %s3 = sld [smem:[#allocation0]]
  $region26: #{tpu_custom_call.1} parent=0
    _
  %s5 = ssub.s32 1, %s3
  %s6 = scalar_select 0, %s5, %s3
  $region1: #{tpu_custom_call.1} parent=0
    #allocation2 [shape = 'u8[32768]{0}', space=vmem, size = 0x8000, scoped, tag = 'input window, operand 0, single buffered']
    #allocation3 [shape = 's32[1]{0}', space=sflag, size = 0x4, scoped, tag = 'scoped memory for tpu_custom_call.1']
    #allocation4 [shape = 's32[1]{0}', space=sflag, size = 0x4, scoped, tag = 'scoped memory for tpu_custom_call.1']
    #allocation5 [shape = 'u8[8192]{0}', space=vmem, size = 0x2000, scoped, tag = 'input window, operand 1, single buffered']
    #allocation6 [shape = 's32[1]{0}', space=sflag, size = 0x4, scoped, tag = 'scoped memory for tpu_custom_call.1']
    #allocation7 [shape = 'u8[16384]{0}', space=vmem, size = 0x4000, scoped, tag = 'output window, operand 0, single buffered']
    %7 = vsyncpa [#allocation3], 0
    %8 = vsyncpa [#allocation6], 0
    %9 = vsyncpa [#allocation4], 0
    // Predicated region
    $region2: #{tpu_custom_call.1} parent=1 // pred_check
      _
    $region3: #{tpu_custom_call.1} parent=1 // pred_check_branch
      %11 = sbr.rel (0) target = $region5
    $region4: #{tpu_custom_call.1} parent=1 // pred_region
      %13 = vsyncadd [#allocation3], 0
      %s14 = sshll.u32 %s0, 4
      %s15 = int_to_ptr.hbm [resolvable:$true] %s14
      %s16 = sshll.u32 [#allocation2], 4
      %s17 = int_to_ptr.vmem [resolvable:$true] %s16
      %22 = dma.hbm_to_vmem [thread:$0]  %s15, 1024, %s17, [#allocation3], 256, 256, 16
    $region5: #{tpu_custom_call.1} parent=1 // pred_fallthru
      _
    // Predicated region
    $region6: #{tpu_custom_call.1} parent=1 // pred_check
      _
    $region7: #{tpu_custom_call.1} parent=1 // pred_check_branch
      %24 = sbr.rel (0) target = $region9
    $region8: #{tpu_custom_call.1} parent=1 // pred_region
      %26 = vsyncadd [#allocation6], 0
      %s27 = sshll.u32 %s1, 4
      %s28 = int_to_ptr.hbm [resolvable:$true] %s27
      %s29 = sshll.u32 [#allocation5], 4
      %s30 = int_to_ptr.vmem [resolvable:$true] %s29
      %35 = dma.hbm_to_vmem [thread:$0]  %s28, 256, %s30, [#allocation6], 64, 64, 4
    $region9: #{tpu_custom_call.1} parent=1 // pred_fallthru
      _
    // Predicated region
    $region10: #{tpu_custom_call.1} parent=1 // pred_check
      _
    $region11: #{tpu_custom_call.1} parent=1 // pred_check_branch
      %37 = sbr.rel (0) target = $region13
    $region12: #{tpu_custom_call.1} parent=1 // pred_region
      %39 = dma.done [#allocation3], 1024
    $region13: #{tpu_custom_call.1} parent=1 // pred_fallthru
      _
    // Predicated region
    $region14: #{tpu_custom_call.1} parent=1 // pred_check
      _
    $region15: #{tpu_custom_call.1} parent=1 // pred_check_branch
      %41 = sbr.rel (0) target = $region17
    $region16: #{tpu_custom_call.1} parent=1 // pred_region
      %43 = dma.done [#allocation6], 256
    $region17: #{tpu_custom_call.1} parent=1 // pred_fallthru
      _
    %v44 = vld [vmem:[#allocation5] sm:$0xf]
    %v45 = vld [vmem:[#allocation5 + $0x4] sm:$0xf]
    %v46 = vld [vmem:[#allocation5 + $0x8] sm:$0xf]
    %v47 = vld [vmem:[#allocation5 + $0xc] sm:$0xf]
    %v48 = vld [vmem:[#allocation2] sm:$0xff]
    %v49 = vld [vmem:[#allocation2 + $0x8] sm:$0xff]
    %v50 = vld [vmem:[#allocation2 + $0x10] sm:$0xff]
    %v51 = vld [vmem:[#allocation2 + $0x18] sm:$0xff]
    %v52 = vld [vmem:[#allocation2 + $0x20] sm:$0xff]
    %v53 = vld [vmem:[#allocation2 + $0x28] sm:$0xff]
    %v54 = vld [vmem:[#allocation2 + $0x30] sm:$0xff]
    %v55 = vld [vmem:[#allocation2 + $0x38] sm:$0xff]
    %57 = vset.pattern.permute.xlu0 0
    %58 = vperm.xlu0 %57, %v44
    %v59 = vpop.permute.xlu0 %58
    %62 = vset.pattern.permute.xlu0 0
    %63 = vperm.xlu0 %62, %v45
    %v64 = vpop.permute.xlu0 %63
    %67 = vset.pattern.permute.xlu0 0
    %68 = vperm.xlu0 %67, %v46
    %v69 = vpop.permute.xlu0 %68
    %72 = vset.pattern.permute.xlu0 0
    %73 = vperm.xlu0 %72, %v47
    %v74 = vpop.permute.xlu0 %73
    %v76 = vperm.slane %v48, 0
    %v77 = vperm.slane %v49, 0
    %v78 = vperm.slane %v50, 0
    %v79 = vperm.slane %v51, 0
    %v80 = vperm.slane %v52, 0
    %v81 = vperm.slane %v53, 0
    %v82 = vperm.slane %v54, 0
    %v83 = vperm.slane %v55, 0
    %v84 = vmul.f32 %v59, %v76
    %v85 = vmul.f32 %v59, %v77
    %v86 = vmul.f32 %v64, %v78
    %v87 = vmul.f32 %v64, %v79
    %v88 = vmul.f32 %v69, %v80
    %v89 = vmul.f32 %v69, %v81
    %v90 = vmul.f32 %v74, %v82
    %v91 = vmul.f32 %v74, %v83
    %92 = vset.pattern.permute.xlu0 8
    %93 = vperm.xlu0 %92, %v44
    %v94 = vpop.permute.xlu0 %93
    %96 = vset.pattern.permute.xlu0 8
    %97 = vperm.xlu0 %96, %v45
    %v98 = vpop.permute.xlu0 %97
    %100 = vset.pattern.permute.xlu0 8
    %101 = vperm.xlu0 %100, %v46
    %v102 = vpop.permute.xlu0 %101
    %104 = vset.pattern.permute.xlu0 8
    %105 = vperm.xlu0 %104, %v47
    %v106 = vpop.permute.xlu0 %105
    %v108 = vadd.f32 %v94, %v84
    %v109 = vadd.f32 %v94, %v85
    %v110 = vadd.f32 %v98, %v86
    %v111 = vadd.f32 %v98, %v87
    %v112 = vadd.f32 %v102, %v88
    %v113 = vadd.f32 %v102, %v89
    %v114 = vadd.f32 %v106, %v90
    %v115 = vadd.f32 %v106, %v91
    %116 = vset.pattern.permute.xlu0 1
    %117 = vperm.xlu0 %116, %v44
    %v118 = vpop.permute.xlu0 %117
    %120 = vset.pattern.permute.xlu0 1
    %121 = vperm.xlu0 %120, %v45
    %v122 = vpop.permute.xlu0 %121
    %124 = vset.pattern.permute.xlu0 1
    %125 = vperm.xlu0 %124, %v46
    %v126 = vpop.permute.xlu0 %125
    %128 = vset.pattern.permute.xlu0 1
    %129 = vperm.xlu0 %128, %v47
    %v130 = vpop.permute.xlu0 %129
    %v132 = vperm.slane %v48, 1
    %v133 = vperm.slane %v49, 1
    %v134 = vperm.slane %v50, 1
    %v135 = vperm.slane %v51, 1
    %v136 = vperm.slane %v52, 1
    %v137 = vperm.slane %v53, 1
    %v138 = vperm.slane %v54, 1
    %v139 = vperm.slane %v55, 1
    %v140 = vmul.f32 %v118, %v132
    %v141 = vmul.f32 %v118, %v133
    %v142 = vmul.f32 %v122, %v134
    %v143 = vmul.f32 %v122, %v135
    %v144 = vmul.f32 %v126, %v136
    %v145 = vmul.f32 %v126, %v137
    %v146 = vmul.f32 %v130, %v138
    %v147 = vmul.f32 %v130, %v139
    %v148 = vadd.f32 %v108, %v140
    %v149 = vadd.f32 %v109, %v141
    %v150 = vadd.f32 %v110, %v142
    %v151 = vadd.f32 %v111, %v143
    %v152 = vadd.f32 %v112, %v144
    %v153 = vadd.f32 %v113, %v145
    %v154 = vadd.f32 %v114, %v146
    %v155 = vadd.f32 %v115, %v147
    %156 = vset.pattern.permute.xlu0 2
    %157 = vperm.xlu0 %156, %v44
    %v158 = vpop.permute.xlu0 %157
    %160 = vset.pattern.permute.xlu0 2
    %161 = vperm.xlu0 %160, %v45
    %v162 = vpop.permute.xlu0 %161
    %164 = vset.pattern.permute.xlu0 2
    %165 = vperm.xlu0 %164, %v46
    %v166 = vpop.permute.xlu0 %165
    %168 = vset.pattern.permute.xlu0 2
    %169 = vperm.xlu0 %168, %v47
    %v170 = vpop.permute.xlu0 %169
    %v172 = vperm.slane %v48, 2
    %v173 = vperm.slane %v49, 2
    %v174 = vperm.slane %v50, 2
    %v175 = vperm.slane %v51, 2
    %v176 = vperm.slane %v52, 2
    %v177 = vperm.slane %v53, 2
    %v178 = vperm.slane %v54, 2
    %v179 = vperm.slane %v55, 2
    %v180 = vmul.f32 %v158, %v172
    %v181 = vmul.f32 %v158, %v173
    %v182 = vmul.f32 %v162, %v174
    %v183 = vmul.f32 %v162, %v175
    %v184 = vmul.f32 %v166, %v176
    %v185 = vmul.f32 %v166, %v177
    %v186 = vmul.f32 %v170, %v178
    %v187 = vmul.f32 %v170, %v179
    %v188 = vadd.f32 %v148, %v180
    %v189 = vadd.f32 %v149, %v181
    %v190 = vadd.f32 %v150, %v182
    %v191 = vadd.f32 %v151, %v183
    %v192 = vadd.f32 %v152, %v184
    %v193 = vadd.f32 %v153, %v185
    %v194 = vadd.f32 %v154, %v186
    %v195 = vadd.f32 %v155, %v187
    %196 = vset.pattern.permute.xlu0 3
    %197 = vperm.xlu0 %196, %v44
    %v198 = vpop.permute.xlu0 %197
    %200 = vset.pattern.permute.xlu0 3
    %201 = vperm.xlu0 %200, %v45
    %v202 = vpop.permute.xlu0 %201
    %204 = vset.pattern.permute.xlu0 3
    %205 = vperm.xlu0 %204, %v46
    %v206 = vpop.permute.xlu0 %205
    %208 = vset.pattern.permute.xlu0 3
    %209 = vperm.xlu0 %208, %v47
    %v210 = vpop.permute.xlu0 %209
    %v212 = vperm.slane %v48, 3
    %v213 = vperm.slane %v49, 3
    %v214 = vperm.slane %v50, 3
    %v215 = vperm.slane %v51, 3
    %v216 = vperm.slane %v52, 3
    %v217 = vperm.slane %v53, 3
    %v218 = vperm.slane %v54, 3
    %v219 = vperm.slane %v55, 3
    %v220 = vmul.f32 %v198, %v212
    %v221 = vmul.f32 %v198, %v213
    %v222 = vmul.f32 %v202, %v214
    %v223 = vmul.f32 %v202, %v215
    %v224 = vmul.f32 %v206, %v216
    %v225 = vmul.f32 %v206, %v217
    %v226 = vmul.f32 %v210, %v218
    %v227 = vmul.f32 %v210, %v219
    %v228 = vadd.f32 %v188, %v220
    %v229 = vadd.f32 %v189, %v221
    %v230 = vadd.f32 %v190, %v222
    %v231 = vadd.f32 %v191, %v223
    %v232 = vadd.f32 %v192, %v224
    %v233 = vadd.f32 %v193, %v225
    %v234 = vadd.f32 %v194, %v226
    %v235 = vadd.f32 %v195, %v227
    %236 = vset.pattern.permute.xlu0 4
    %237 = vperm.xlu0 %236, %v44
    %v238 = vpop.permute.xlu0 %237
    %240 = vset.pattern.permute.xlu0 4
    %241 = vperm.xlu0 %240, %v45
    %v242 = vpop.permute.xlu0 %241
    %244 = vset.pattern.permute.xlu0 4
    %245 = vperm.xlu0 %244, %v46
    %v246 = vpop.permute.xlu0 %245
    %248 = vset.pattern.permute.xlu0 4
    %249 = vperm.xlu0 %248, %v47
    %v250 = vpop.permute.xlu0 %249
    %v252 = vperm.slane %v48, 4
    %v253 = vperm.slane %v49, 4
    %v254 = vperm.slane %v50, 4
    %v255 = vperm.slane %v51, 4
    %v256 = vperm.slane %v52, 4
    %v257 = vperm.slane %v53, 4
    %v258 = vperm.slane %v54, 4
    %v259 = vperm.slane %v55, 4
    %v260 = vmul.f32 %v238, %v252
    %v261 = vmul.f32 %v238, %v253
    %v262 = vmul.f32 %v242, %v254
    %v263 = vmul.f32 %v242, %v255
    %v264 = vmul.f32 %v246, %v256
    %v265 = vmul.f32 %v246, %v257
    %v266 = vmul.f32 %v250, %v258
    %v267 = vmul.f32 %v250, %v259
    %v268 = vadd.f32 %v228, %v260
    %v269 = vadd.f32 %v229, %v261
    %v270 = vadd.f32 %v230, %v262
    %v271 = vadd.f32 %v231, %v263
    %v272 = vadd.f32 %v232, %v264
    %v273 = vadd.f32 %v233, %v265
    %v274 = vadd.f32 %v234, %v266
    %v275 = vadd.f32 %v235, %v267
    %276 = vset.pattern.permute.xlu0 5
    %277 = vperm.xlu0 %276, %v44
    %v278 = vpop.permute.xlu0 %277
    %280 = vset.pattern.permute.xlu0 5
    %281 = vperm.xlu0 %280, %v45
    %v282 = vpop.permute.xlu0 %281
    %284 = vset.pattern.permute.xlu0 5
    %285 = vperm.xlu0 %284, %v46
    %v286 = vpop.permute.xlu0 %285
    %288 = vset.pattern.permute.xlu0 5
    %289 = vperm.xlu0 %288, %v47
    %v290 = vpop.permute.xlu0 %289
    %v292 = vperm.slane %v48, 5
    %v293 = vperm.slane %v49, 5
    %v294 = vperm.slane %v50, 5
    %v295 = vperm.slane %v51, 5
    %v296 = vperm.slane %v52, 5
    %v297 = vperm.slane %v53, 5
    %v298 = vperm.slane %v54, 5
    %v299 = vperm.slane %v55, 5
    %v300 = vmul.f32 %v278, %v292
    %v301 = vmul.f32 %v278, %v293
    %v302 = vmul.f32 %v282, %v294
    %v303 = vmul.f32 %v282, %v295
    %v304 = vmul.f32 %v286, %v296
    %v305 = vmul.f32 %v286, %v297
    %v306 = vmul.f32 %v290, %v298
    %v307 = vmul.f32 %v290, %v299
    %v308 = vadd.f32 %v268, %v300
    %v309 = vadd.f32 %v269, %v301
    %v310 = vadd.f32 %v270, %v302
    %v311 = vadd.f32 %v271, %v303
    %v312 = vadd.f32 %v272, %v304
    %v313 = vadd.f32 %v273, %v305
    %v314 = vadd.f32 %v274, %v306
    %v315 = vadd.f32 %v275, %v307
    %316 = vset.pattern.permute.xlu0 6
    %317 = vperm.xlu0 %316, %v44
    %v318 = vpop.permute.xlu0 %317
    %320 = vset.pattern.permute.xlu0 6
    %321 = vperm.xlu0 %320, %v45
    %v322 = vpop.permute.xlu0 %321
    %324 = vset.pattern.permute.xlu0 6
    %325 = vperm.xlu0 %324, %v46
    %v326 = vpop.permute.xlu0 %325
    %328 = vset.pattern.permute.xlu0 6
    %329 = vperm.xlu0 %328, %v47
    %v330 = vpop.permute.xlu0 %329
    %v332 = vperm.slane %v48, 6
    %v333 = vperm.slane %v49, 6
    %v334 = vperm.slane %v50, 6
    %v335 = vperm.slane %v51, 6
    %v336 = vperm.slane %v52, 6
    %v337 = vperm.slane %v53, 6
    %v338 = vperm.slane %v54, 6
    %v339 = vperm.slane %v55, 6
    %v340 = vmul.f32 %v318, %v332
    %v341 = vmul.f32 %v318, %v333
    %v342 = vmul.f32 %v322, %v334
    %v343 = vmul.f32 %v322, %v335
    %v344 = vmul.f32 %v326, %v336
    %v345 = vmul.f32 %v326, %v337
    %v346 = vmul.f32 %v330, %v338
    %v347 = vmul.f32 %v330, %v339
    %v348 = vadd.f32 %v308, %v340
    %v349 = vadd.f32 %v309, %v341
    %v350 = vadd.f32 %v310, %v342
    %v351 = vadd.f32 %v311, %v343
    %v352 = vadd.f32 %v312, %v344
    %v353 = vadd.f32 %v313, %v345
    %v354 = vadd.f32 %v314, %v346
    %v355 = vadd.f32 %v315, %v347
    %356 = vset.pattern.permute.xlu0 7
    %357 = vperm.xlu0 %356, %v44
    %v358 = vpop.permute.xlu0 %357
    %360 = vset.pattern.permute.xlu0 7
    %361 = vperm.xlu0 %360, %v45
    %v362 = vpop.permute.xlu0 %361
    %364 = vset.pattern.permute.xlu0 7
    %365 = vperm.xlu0 %364, %v46
    %v366 = vpop.permute.xlu0 %365
    %368 = vset.pattern.permute.xlu0 7
    %369 = vperm.xlu0 %368, %v47
    %v370 = vpop.permute.xlu0 %369
    %v372 = vperm.slane %v48, 7
    %v373 = vperm.slane %v49, 7
    %v374 = vperm.slane %v50, 7
    %v375 = vperm.slane %v51, 7
    %v376 = vperm.slane %v52, 7
    %v377 = vperm.slane %v53, 7
    %v378 = vperm.slane %v54, 7
    %v379 = vperm.slane %v55, 7
    %v380 = vmul.f32 %v358, %v372
    %v381 = vmul.f32 %v358, %v373
    %v382 = vmul.f32 %v362, %v374
    %v383 = vmul.f32 %v362, %v375
    %v384 = vmul.f32 %v366, %v376
    %v385 = vmul.f32 %v366, %v377
    %v386 = vmul.f32 %v370, %v378
    %v387 = vmul.f32 %v370, %v379
    %v388 = vadd.f32 %v348, %v380
    %v389 = vadd.f32 %v349, %v381
    %v390 = vadd.f32 %v350, %v382
    %v391 = vadd.f32 %v351, %v383
    %v392 = vadd.f32 %v352, %v384
    %v393 = vadd.f32 %v353, %v385
    %v394 = vadd.f32 %v354, %v386
    %v395 = vadd.f32 %v355, %v387
    %v404 = vrot.slane %v389, 4
    %v405 = vrot.slane %v391, 4
    %v406 = vrot.slane %v393, 4
    %v407 = vrot.slane %v395, 4
    %vm408 = vcmask 1043456
    %v409 = vsel %vm408, %v388, %v404
    %v410 = vsel %vm408, %v390, %v405
    %v411 = vsel %vm408, %v392, %v406
    %v412 = vsel %vm408, %v394, %v407
    %417 = vst [vmem:[#allocation7] sm:$0xff] %v409
    %418 = vst [vmem:[#allocation7 + $0x8] sm:$0xff] %v410
    %419 = vst [vmem:[#allocation7 + $0x10] sm:$0xff] %v411
    %420 = vst [vmem:[#allocation7 + $0x18] sm:$0xff] %v412
    // Predicated region
    $region18: #{tpu_custom_call.1} parent=1 // pred_check
      _
    $region19: #{tpu_custom_call.1} parent=1 // pred_check_branch
      %422 = sbr.rel (0) target = $region21
    $region20: #{tpu_custom_call.1} parent=1 // pred_region
      %424 = vsyncadd [#allocation4], 0
      %s425 = sshll.u32 [#allocation7], 4
      %s426 = int_to_ptr.vmem [resolvable:$true] %s425
      %s427 = sshll.u32 %s2, 4
      %s428 = int_to_ptr.hbm [resolvable:$true] %s427
      %433 = dma.vmem_to_hbm [thread:$0]  %s426, 512, %s428, [#allocation4], 128, 128, 8
    $region21: #{tpu_custom_call.1} parent=1 // pred_fallthru
      _
    // Predicated region
    $region22: #{tpu_custom_call.1} parent=1 // pred_check
      _
    $region23: #{tpu_custom_call.1} parent=1 // pred_check_branch
      %435 = sbr.rel (0) target = $region25
    $region24: #{tpu_custom_call.1} parent=1 // pred_region
      %437 = dma.done [#allocation4], 512
    $region25: #{tpu_custom_call.1} parent=1 // pred_fallthru
      _
    %438 = vsyncpa [#allocation3], 1
    %439 = vsyncpa [#allocation6], 1
    %440 = vsyncpa [#allocation4], 1

</llo_original>
